<compile_context>
chip_gen: v7x
topology: tpu7x:2x2x1
jax: 0.10.0
libtpu: 0.0.40
codegen_flags: <defaults>
</compile_context>

<pallas_src>
import functools

import jax
import jax.numpy as jnp
from jax.experimental import pallas as pl
from jax.experimental.pallas import tpu as pltpu


def _relu6_f32(x):
    # nn.ReLU6: clamp(x, 0, 6), done in f32 (v5e VPU has no bf16 elementwise).
    return jnp.minimum(jnp.maximum(x, 0.0), 6.0)


def q_fcn_kernel(x_ref, w1_ref, b1_ref, w2_ref, b2_ref, w3_ref, b3_ref, out_ref):
    # x_ref: [TM, S] bf16 (streamed); weights bf16 (resident); biases f32.
    x = x_ref[...]

    h1 = jnp.dot(x, w1_ref[...], preferred_element_type=jnp.float32) + b1_ref[...]
    h1 = _relu6_f32(h1).astype(jnp.bfloat16)

    h2 = jnp.dot(h1, w2_ref[...], preferred_element_type=jnp.float32) + b2_ref[...]
    h2 = _relu6_f32(h2).astype(jnp.bfloat16)

    h3 = jnp.dot(h2, w3_ref[...], preferred_element_type=jnp.float32) + b3_ref[...]

    # Lane-dense (TM, 128) store; real action columns are [:action_size].
    out_ref[...] = h3.astype(out_ref.dtype)


def _round_up(x, m):
    return ((x + m - 1) // m) * m


def q_fcn_forward(state, params, *, tile_m=512):
    """state: [B, state_size] f32; params: dict of transposed weights/biases (f32)."""
    w1, b1 = params["w1"], params["b1"]
    w2, b2 = params["w2"], params["b2"]
    w3, b3 = params["w3"], params["b3"]

    B, S = state.shape
    H1 = w1.shape[1]
    H2 = w2.shape[1]
    A = w3.shape[1]

    # Lane-dense output width (multiple of 128).
    A_pad = _round_up(max(A, 128), 128)

    # Batch tile: big enough to amortize per-step overhead, small enough to not
    # over-pad tiny batches. Pad batch to a multiple of the tile.
    TM = min(tile_m, _round_up(B, 8))
    B_pad = _round_up(B, TM)
    grid_m = B_pad // TM

    # Pad final layer to lane-dense width with zero columns (math unchanged).
    w3p = jnp.zeros((H2, A_pad), jnp.float32).at[:, :A].set(w3)
    b3p = jnp.zeros((1, A_pad), jnp.float32).at[:, :A].set(b3)

    # bf16 streaming / weights; f32 biases + accumulation inside the kernel.
    x_bf = jnp.pad(state, ((0, B_pad - B), (0, 0))).astype(jnp.bfloat16)
    w1_bf = w1.astype(jnp.bfloat16)
    w2_bf = w2.astype(jnp.bfloat16)
    w3_bf = w3p.astype(jnp.bfloat16)

    flops = 2 * B_pad * (S * H1 + H1 * H2 + H2 * A_pad)
    bytes_accessed = (
        x_bf.size * 2 + B_pad * A_pad * 4                     # activation stream
        + (w1_bf.size + w2_bf.size + w3_bf.size) * 2          # bf16 weights
        + (b1.size + b2.size + b3p.size) * 4                  # f32 biases
    )

    out = pl.pallas_call(
        q_fcn_kernel,
        out_shape=jax.ShapeDtypeStruct((B_pad, A_pad), jnp.float32),
        grid_spec=pltpu.PrefetchScalarGridSpec(
            num_scalar_prefetch=0,
            grid=(grid_m,),
            in_specs=[
                pl.BlockSpec((TM, S), lambda i: (i, 0)),        # x: streamed
                pl.BlockSpec((S, H1), lambda i: (0, 0)),        # w1: resident
                pl.BlockSpec((1, H1), lambda i: (0, 0)),        # b1
                pl.BlockSpec((H1, H2), lambda i: (0, 0)),       # w2
                pl.BlockSpec((1, H2), lambda i: (0, 0)),        # b2
                pl.BlockSpec((H2, A_pad), lambda i: (0, 0)),    # w3 (padded)
                pl.BlockSpec((1, A_pad), lambda i: (0, 0)),     # b3 (padded)
            ],
            out_specs=pl.BlockSpec((TM, A_pad), lambda i: (i, 0)),
        ),
        compiler_params=pltpu.CompilerParams(
            dimension_semantics=("parallel",),  # megacore sharding on v7x
        ),
        cost_estimate=pl.CostEstimate(
            flops=flops, transcendentals=0, bytes_accessed=bytes_accessed
        ),
    )(x_bf, w1_bf, b1, w2_bf, b2, w3_bf, b3p)

    return out[:B, :A]


def init_params(key, state_size, action_size):
    """Deterministic init mimicking PyTorch nn.Linear default (U(-1/sqrt(fan_in), ..))."""
    dims = [
        (state_size, state_size * 16),
        (state_size * 16, state_size * 8),
        (state_size * 8, action_size),
    ]
    params = {}
    for i, (fan_in, fan_out) in enumerate(dims, start=1):
        key, kw, kb = jax.random.split(key, 3)
        bound = 1.0 / jnp.sqrt(jnp.float32(fan_in))
        # stored as [in, out] (transposed vs. PyTorch's [out, in])
        params[f"w{i}"] = jax.random.uniform(
            kw, (fan_in, fan_out), jnp.float32, -bound, bound
        )
        params[f"b{i}"] = jax.random.uniform(
            kb, (1, fan_out), jnp.float32, -bound, bound
        )
    return params


def reference_forward_bf16(state, params):
    """Mirrors the kernel's bf16-streaming / f32-accumulation math."""
    bf = jnp.bfloat16
    x = state.astype(bf)
    h = jnp.dot(x, params["w1"].astype(bf), preferred_element_type=jnp.float32)
    h = _relu6_f32(h + params["b1"]).astype(bf)
    h = jnp.dot(h, params["w2"].astype(bf), preferred_element_type=jnp.float32)
    h = _relu6_f32(h + params["b2"]).astype(bf)
    return jnp.dot(h, params["w3"].astype(bf), preferred_element_type=jnp.float32) + params["b3"]


def reference_forward_f32(state, params):
    h = _relu6_f32(state @ params["w1"] + params["b1"])
    h = _relu6_f32(h @ params["w2"] + params["b2"])
    return h @ params["w3"] + params["b3"]


if __name__ == "__main__":
    state_size = 8       # -> hidden1 = 128, hidden2 = 64
    action_size = 4
    batch = 2

    key = jax.random.PRNGKey(0)
    key, kx = jax.random.split(key)
    state = jax.random.normal(kx, (batch, state_size), dtype=jnp.float32)

    params = init_params(key, state_size, action_size)

    out = q_fcn_forward(state, params)
    out = jax.block_until_ready(out)
    assert out.shape == (batch, action_size)

    ref_bf = reference_forward_bf16(state, params)
    ref_f32 = reference_forward_f32(state, params)
    assert jnp.allclose(out, ref_bf, atol=1e-3, rtol=1e-3), "mismatch vs bf16-matched reference"
    assert jnp.allclose(out, ref_f32, atol=3e-2, rtol=3e-2), "mismatch vs f32 reference"

    print("KERNEL_OK")
</pallas_src>

<mosaic_0001>
module attributes {stable_mosaic.version = 11 : i64} {
  func.func @q_fcn_kernel(%arg0: i32, %arg1: memref<8x8xbf16, #tpu.memory_space<vmem>>, %arg2: memref<8x128xbf16, #tpu.memory_space<vmem>>, %arg3: memref<1x128xf32, #tpu.memory_space<vmem>>, %arg4: memref<128x64xbf16, #tpu.memory_space<vmem>>, %arg5: memref<1x64xf32, #tpu.memory_space<vmem>>, %arg6: memref<64x128xbf16, #tpu.memory_space<vmem>>, %arg7: memref<1x128xf32, #tpu.memory_space<vmem>>, %arg8: memref<8x128xf32, #tpu.memory_space<vmem>>) attributes {dimension_semantics = [#tpu.dimension_semantics<parallel>], iteration_bounds = array<i64: 1>, scalar_prefetch = 0 : i64, scratch_operands = 0 : i64, tpu.core_type = #tpu.core_type<tc>, window_params = [{transform_indices = @transform_0, window_bounds = array<i64: 8, 8>}, {pipeline_mode = #tpu.pipeline_mode<synchronous>, transform_indices = @transform_1, window_bounds = array<i64: 8, 128>}, {pipeline_mode = #tpu.pipeline_mode<synchronous>, transform_indices = @transform_2, window_bounds = array<i64: 1, 128>}, {pipeline_mode = #tpu.pipeline_mode<synchronous>, transform_indices = @transform_3, window_bounds = array<i64: 128, 64>}, {pipeline_mode = #tpu.pipeline_mode<synchronous>, transform_indices = @transform_4, window_bounds = array<i64: 1, 64>}, {pipeline_mode = #tpu.pipeline_mode<synchronous>, transform_indices = @transform_5, window_bounds = array<i64: 64, 128>}, {pipeline_mode = #tpu.pipeline_mode<synchronous>, transform_indices = @transform_6, window_bounds = array<i64: 1, 128>}, {transform_indices = @transform_7, window_bounds = array<i64: 8, 128>}]} {
    %c0 = arith.constant 0 : index
    %c0_0 = arith.constant 0 : index
    %0 = vector.load %arg1[%c0, %c0_0] : memref<8x8xbf16, #tpu.memory_space<vmem>>, vector<8x8xbf16>
    %c0_1 = arith.constant 0 : index
    %c0_2 = arith.constant 0 : index
    %1 = vector.load %arg2[%c0_1, %c0_2] : memref<8x128xbf16, #tpu.memory_space<vmem>>, vector<8x128xbf16>
    %cst = arith.constant dense<0.000000e+00> : vector<8x128xf32>
    %2 = tpu.matmul %0, %1, %cst {dimension_numbers = #tpu.dot_dimension_numbers<[1], [0], [0], [1], [0, 0, 1, 1], [], []>} : vector<8x8xbf16>, vector<8x128xbf16>, vector<8x128xf32> -> vector<8x128xf32>
    %c0_3 = arith.constant 0 : index
    %c0_4 = arith.constant 0 : index
    %3 = vector.load %arg3[%c0_3, %c0_4] : memref<1x128xf32, #tpu.memory_space<vmem>>, vector<1x128xf32>
    %4 = vector.broadcast %3 : vector<1x128xf32> to vector<8x128xf32>
    %5 = arith.addf %2, %4 : vector<8x128xf32>
    %cst_5 = arith.constant 0.000000e+00 : f32
    %6 = vector.broadcast %cst_5 : f32 to vector<8x128xf32>
    %7 = arith.maximumf %5, %6 : vector<8x128xf32>
    %cst_6 = arith.constant 6.000000e+00 : f32
    %8 = vector.broadcast %cst_6 : f32 to vector<8x128xf32>
    %9 = arith.minimumf %7, %8 : vector<8x128xf32>
    %10 = arith.truncf %9 : vector<8x128xf32> to vector<8x128xbf16>
    %c0_7 = arith.constant 0 : index
    %c0_8 = arith.constant 0 : index
    %11 = vector.load %arg4[%c0_7, %c0_8] : memref<128x64xbf16, #tpu.memory_space<vmem>>, vector<128x64xbf16>
    %cst_9 = arith.constant dense<0.000000e+00> : vector<8x64xf32>
    %12 = tpu.matmul %10, %11, %cst_9 {dimension_numbers = #tpu.dot_dimension_numbers<[1], [0], [0], [1], [0, 0, 1, 1], [], []>} : vector<8x128xbf16>, vector<128x64xbf16>, vector<8x64xf32> -> vector<8x64xf32>
    %c0_10 = arith.constant 0 : index
    %c0_11 = arith.constant 0 : index
    %13 = vector.load %arg5[%c0_10, %c0_11] : memref<1x64xf32, #tpu.memory_space<vmem>>, vector<1x64xf32>
    %14 = vector.broadcast %13 : vector<1x64xf32> to vector<8x64xf32>
    %15 = arith.addf %12, %14 : vector<8x64xf32>
    %cst_12 = arith.constant 0.000000e+00 : f32
    %16 = vector.broadcast %cst_12 : f32 to vector<8x64xf32>
    %17 = arith.maximumf %15, %16 : vector<8x64xf32>
    %cst_13 = arith.constant 6.000000e+00 : f32
    %18 = vector.broadcast %cst_13 : f32 to vector<8x64xf32>
    %19 = arith.minimumf %17, %18 : vector<8x64xf32>
    %20 = arith.truncf %19 : vector<8x64xf32> to vector<8x64xbf16>
    %c0_14 = arith.constant 0 : index
    %c0_15 = arith.constant 0 : index
    %21 = vector.load %arg6[%c0_14, %c0_15] : memref<64x128xbf16, #tpu.memory_space<vmem>>, vector<64x128xbf16>
    %cst_16 = arith.constant dense<0.000000e+00> : vector<8x128xf32>
    %22 = tpu.matmul %20, %21, %cst_16 {dimension_numbers = #tpu.dot_dimension_numbers<[1], [0], [0], [1], [0, 0, 1, 1], [], []>} : vector<8x64xbf16>, vector<64x128xbf16>, vector<8x128xf32> -> vector<8x128xf32>
    %c0_17 = arith.constant 0 : index
    %c0_18 = arith.constant 0 : index
    %23 = vector.load %arg7[%c0_17, %c0_18] : memref<1x128xf32, #tpu.memory_space<vmem>>, vector<1x128xf32>
    %24 = vector.broadcast %23 : vector<1x128xf32> to vector<8x128xf32>
    %25 = arith.addf %22, %24 : vector<8x128xf32>
    %c0_19 = arith.constant 0 : index
    %c0_20 = arith.constant 0 : index
    %26 = vector.load %arg8[%c0_19, %c0_20] : memref<8x128xf32, #tpu.memory_space<vmem>>, vector<8x128xf32>
    tpu.vector_store %arg8[%c0_19, %c0_20], %25 {strides = array<i32>} : memref<8x128xf32, #tpu.memory_space<vmem>>, vector<8x128xf32>,
    return
  }
  func.func @transform_0(%arg0: i32) -> (i32, i32) {
    %c0_i32 = arith.constant 0 : i32
    %c0_i32_0 = arith.constant 0 : i32
    return %arg0, %c0_i32 : i32, i32
  }
  func.func @transform_1(%arg0: i32) -> (i32, i32) {
    %c0_i32 = arith.constant 0 : i32
    %c0_i32_0 = arith.constant 0 : i32
    %c0_i32_1 = arith.constant 0 : i32
    return %c0_i32, %c0_i32_0 : i32, i32
  }
  func.func @transform_2(%arg0: i32) -> (i32, i32) {
    %c0_i32 = arith.constant 0 : i32
    %c0_i32_0 = arith.constant 0 : i32
    %c0_i32_1 = arith.constant 0 : i32
    return %c0_i32, %c0_i32_0 : i32, i32
  }
  func.func @transform_3(%arg0: i32) -> (i32, i32) {
    %c0_i32 = arith.constant 0 : i32
    %c0_i32_0 = arith.constant 0 : i32
    %c0_i32_1 = arith.constant 0 : i32
    return %c0_i32, %c0_i32_0 : i32, i32
  }
  func.func @transform_4(%arg0: i32) -> (i32, i32) {
    %c0_i32 = arith.constant 0 : i32
    %c0_i32_0 = arith.constant 0 : i32
    %c0_i32_1 = arith.constant 0 : i32
    return %c0_i32, %c0_i32_0 : i32, i32
  }
  func.func @transform_5(%arg0: i32) -> (i32, i32) {
    %c0_i32 = arith.constant 0 : i32
    %c0_i32_0 = arith.constant 0 : i32
    %c0_i32_1 = arith.constant 0 : i32
    return %c0_i32, %c0_i32_0 : i32, i32
  }
  func.func @transform_6(%arg0: i32) -> (i32, i32) {
    %c0_i32 = arith.constant 0 : i32
    %c0_i32_0 = arith.constant 0 : i32
    %c0_i32_1 = arith.constant 0 : i32
    return %c0_i32, %c0_i32_0 : i32, i32
  }
  func.func @transform_7(%arg0: i32) -> (i32, i32) {
    %c0_i32 = arith.constant 0 : i32
    %c0_i32_0 = arith.constant 0 : i32
    return %arg0, %c0_i32 : i32, i32
  }
}

</mosaic_0001>

<llo_original>
// kernel: tpu_custom_call.1
$region0: #{tpu_custom_call.1}
  #allocation0 [shape = 'u32[]', space=smem, size = 0x4, offset = 0x4, fixed_abs, tag = 'smem constant byte address 0x4 - core index']
  #allocation1 [shape = 'u32[144,128]{1,0:T(1,128)}', space=vmem, size = 0x12000, scoped, tag = 'internal scratch']
  %s0 = inlined_call_operand.vmem [shape: bf16[8,8], index: 0, kind: input, shape index: {}]
  %s1 = inlined_call_operand.vmem [shape: bf16[8,128], index: 1, kind: input, shape index: {}]
  %s2 = inlined_call_operand.vmem [shape: f32[1,128], index: 2, kind: input, shape index: {}]
  %s3 = inlined_call_operand.vmem [shape: bf16[128,64], index: 3, kind: input, shape index: {}]
  %s4 = inlined_call_operand.vmem [shape: f32[1,64], index: 4, kind: input, shape index: {}]
  %s5 = inlined_call_operand.vmem [shape: bf16[64,128], index: 5, kind: input, shape index: {}]
  %s6 = inlined_call_operand.vmem [shape: f32[1,128], index: 6, kind: input, shape index: {}]
  %s7 = inlined_call_operand.hbm [shape: f32[8,128], index: 7, kind: output, shape index: {}]
  %s8 = sld [smem:[#allocation0]]
  $region38: #{tpu_custom_call.1} parent=0
    _
  %s10 = ssub.s32 1, %s8
  %s11 = scalar_select 0, %s10, %s8
  $region1: #{tpu_custom_call.1} parent=0
    #allocation2 [shape = 'u8[4096]{0}', space=vmem, size = 0x1000, scoped, tag = 'output window, operand 0, single buffered']
    #allocation3 [shape = 's32[1]{0}', space=sflag, size = 0x4, scoped, tag = 'scoped memory for tpu_custom_call.1']
    %12 = vsyncpa [#allocation3], 0
    // Predicated region
    $region2: #{tpu_custom_call.1} parent=1 // pred_check
      _
    $region3: #{tpu_custom_call.1} parent=1 // pred_check_branch
      %14 = sbr.rel (0) target = $region5
    $region4: #{tpu_custom_call.1} parent=1 // pred_region
      _
    $region5: #{tpu_custom_call.1} parent=1 // pred_fallthru
      _
    // Predicated region
    $region6: #{tpu_custom_call.1} parent=1 // pred_check
      _
    $region7: #{tpu_custom_call.1} parent=1 // pred_check_branch
      %16 = sbr.rel (0) target = $region9
    $region8: #{tpu_custom_call.1} parent=1 // pred_region
      _
    $region9: #{tpu_custom_call.1} parent=1 // pred_fallthru
      _
    // Predicated region
    $region10: #{tpu_custom_call.1} parent=1 // pred_check
      _
    $region11: #{tpu_custom_call.1} parent=1 // pred_check_branch
      %18 = sbr.rel (0) target = $region13
    $region12: #{tpu_custom_call.1} parent=1 // pred_region
      _
    $region13: #{tpu_custom_call.1} parent=1 // pred_fallthru
      _
    // Predicated region
    $region14: #{tpu_custom_call.1} parent=1 // pred_check
      _
    $region15: #{tpu_custom_call.1} parent=1 // pred_check_branch
      %20 = sbr.rel (0) target = $region17
    $region16: #{tpu_custom_call.1} parent=1 // pred_region
      _
    $region17: #{tpu_custom_call.1} parent=1 // pred_fallthru
      _
    // Predicated region
    $region18: #{tpu_custom_call.1} parent=1 // pred_check
      _
    $region19: #{tpu_custom_call.1} parent=1 // pred_check_branch
      %22 = sbr.rel (0) target = $region21
    $region20: #{tpu_custom_call.1} parent=1 // pred_region
      _
    $region21: #{tpu_custom_call.1} parent=1 // pred_fallthru
      _
    // Predicated region
    $region22: #{tpu_custom_call.1} parent=1 // pred_check
      _
    $region23: #{tpu_custom_call.1} parent=1 // pred_check_branch
      %24 = sbr.rel (0) target = $region25
    $region24: #{tpu_custom_call.1} parent=1 // pred_region
      _
    $region25: #{tpu_custom_call.1} parent=1 // pred_fallthru
      _
    // Predicated region
    $region26: #{tpu_custom_call.1} parent=1 // pred_check
      _
    $region27: #{tpu_custom_call.1} parent=1 // pred_check_branch
      %26 = sbr.rel (0) target = $region29
    $region28: #{tpu_custom_call.1} parent=1 // pred_region
      _
    $region29: #{tpu_custom_call.1} parent=1 // pred_fallthru
      _
    %v28 = vld [vmem:[%s0] sm:$0xf]
    %v29 = vld [vmem:[%s1] sm:$0xf]
    %v30 = vld [vmem:[%s2] sm:$0x1]
    %v32 = vlaneseq
    %v33 = vshrl.u32 %v32, 7
    %v34 = vsub.s32 0, %v33
    %v35 = vrot.slane %v30, %v34
    %vm37 = vcmask 64512
    %v39 = vsel %vm37, %v28, 0
    %vm41 = vcmask 1043456
    %v43 = vsel %vm41, %v29, 0
    %45 = vmatprep.subr.bf16.mxu0 0
    %46 = vmatpush1.bf16.msra.mxu0 %v43
    %47 = vmatprep.subr.bf16.mxu0 0
    %48 = vmatpush1.bf16.msra.mxu0 0
    %49 = vmatprep.subr.bf16.mxu0 0
    %50 = vmatpush1.bf16.msra.mxu0 0
    %51 = vmatprep.subr.bf16.mxu0 0
    %52 = vmatpush1.bf16.msra.mxu0 0
    %53 = vmatprep.subr.bf16.mxu0 0
    %54 = vmatpush1.bf16.msra.mxu0 0
    %55 = vmatprep.subr.bf16.mxu0 0
    %56 = vmatpush1.bf16.msra.mxu0 0
    %57 = vmatprep.subr.bf16.mxu0 0
    %58 = vmatpush1.bf16.msra.mxu0 0
    %59 = vmatprep.subr.bf16.mxu0 0
    %60 = vmatpush1.bf16.msra.mxu0 0
    %61 = vmatprep.subr.bf16.mxu0 0
    %62 = vmatpush1.bf16.msra.mxu0 0
    %63 = vmatprep.subr.bf16.mxu0 0
    %64 = vmatpush1.bf16.msra.mxu0 0
    %65 = vmatprep.subr.bf16.mxu0 0
    %66 = vmatpush1.bf16.msra.mxu0 0
    %67 = vmatprep.subr.bf16.mxu0 0
    %68 = vmatpush1.bf16.msra.mxu0 0
    %69 = vmatprep.subr.bf16.mxu0 0
    %70 = vmatpush1.bf16.msra.mxu0 0
    %71 = vmatprep.subr.bf16.mxu0 0
    %72 = vmatpush1.bf16.msra.mxu0 0
    %73 = vmatprep.subr.bf16.mxu0 0
    %74 = vmatpush1.bf16.msra.mxu0 0
    %75 = vmatprep.subr.bf16.mxu0 0
    %76 = vmatpush1.bf16.msra.mxu0 0
    %77 = vmatprep.mubr.bf16.mxu0 0
    %78 = vmatmul.mubr.bf16.gmra.mrb[0].mxu0 %v39
    %v79 = vpop.f32.mrb[0].mxu0
    %v80 = vadd.f32 %v35, %v79
    %v81 = vpop.f32.mrb[0].mxu0
    %v82 = vpop.f32.mrb[0].mxu0
    %v83 = vpop.f32.mrb[0].mxu0
    %84 = vdwg.mxu0
    %v85 = vmax.f32 %v80, 0.0
    %v86 = vmin.f32 %v85, 6.0
    %v87 = vpack.c.bf16 %v86, %v86
    %v88 = vld [vmem:[%s3] sm:$0xf]
    %v89 = vld [vmem:[%s3 + $0x4] sm:$0xf]
    %v90 = vld [vmem:[%s3 + $0x8] sm:$0xf]
    %v91 = vld [vmem:[%s3 + $0xc] sm:$0xf]
    %v92 = vld [vmem:[%s3 + $0x10] sm:$0xf]
    %v93 = vld [vmem:[%s3 + $0x14] sm:$0xf]
    %v94 = vld [vmem:[%s3 + $0x18] sm:$0xf]
    %v95 = vld [vmem:[%s3 + $0x1c] sm:$0xf]
    %v96 = vld [vmem:[%s3 + $0x20] sm:$0xf]
    %v97 = vld [vmem:[%s3 + $0x24] sm:$0xf]
    %v98 = vld [vmem:[%s3 + $0x28] sm:$0xf]
    %v99 = vld [vmem:[%s3 + $0x2c] sm:$0xf]
    %v100 = vld [vmem:[%s3 + $0x30] sm:$0xf]
    %v101 = vld [vmem:[%s3 + $0x34] sm:$0xf]
    %v102 = vld [vmem:[%s3 + $0x38] sm:$0xf]
    %v103 = vld [vmem:[%s3 + $0x3c] sm:$0xf]
    %v104 = vld [vmem:[%s4] sm:$0x1]
    %v106 = vlaneseq
    %v107 = vshrl.u32 %v106, 7
    %v108 = vsub.s32 0, %v107
    %v109 = vrot.slane %v104, %v108
    %v127 = vunpack.c.l.b16 %v88
    %v128 = vunpack.c.l.b16 %v89
    %v129 = vunpack.c.l.b16 %v90
    %v130 = vunpack.c.l.b16 %v91
    %v131 = vunpack.c.l.b16 %v92
    %v132 = vunpack.c.l.b16 %v93
    %v133 = vunpack.c.l.b16 %v94
    %v134 = vunpack.c.l.b16 %v95
    %v135 = vunpack.c.l.b16 %v96
    %v136 = vunpack.c.l.b16 %v97
    %v137 = vunpack.c.l.b16 %v98
    %v138 = vunpack.c.l.b16 %v99
    %v139 = vunpack.c.l.b16 %v100
    %v140 = vunpack.c.l.b16 %v101
    %v141 = vunpack.c.l.b16 %v102
    %v142 = vunpack.c.l.b16 %v103
    %v143 = vpack.c.b16 %v128, %v127
    %v144 = vpack.c.b16 %v130, %v129
    %v145 = vpack.c.b16 %v132, %v131
    %v146 = vpack.c.b16 %v134, %v133
    %v147 = vpack.c.b16 %v136, %v135
    %v148 = vpack.c.b16 %v138, %v137
    %v149 = vpack.c.b16 %v140, %v139
    %v150 = vpack.c.b16 %v142, %v141
    %159 = vmatprep.subr.bf16.mxu0 0
    %160 = vmatpush1.bf16.msra.mxu0 %v143
    %161 = vmatprep.subr.bf16.mxu0 0
    %162 = vmatpush1.bf16.msra.mxu0 %v144
    %163 = vmatprep.subr.bf16.mxu0 0
    %164 = vmatpush1.bf16.msra.mxu0 %v145
    %165 = vmatprep.subr.bf16.mxu0 0
    %166 = vmatpush1.bf16.msra.mxu0 %v146
    %167 = vmatprep.subr.bf16.mxu0 0
    %168 = vmatpush1.bf16.msra.mxu0 %v147
    %169 = vmatprep.subr.bf16.mxu0 0
    %170 = vmatpush1.bf16.msra.mxu0 %v148
    %171 = vmatprep.subr.bf16.mxu0 0
    %172 = vmatpush1.bf16.msra.mxu0 %v149
    %173 = vmatprep.subr.bf16.mxu0 0
    %174 = vmatpush1.bf16.msra.mxu0 %v150
    %175 = vmatprep.subr.bf16.mxu0 0
    %176 = vmatpush1.bf16.msra.mxu0 0
    %177 = vmatprep.subr.bf16.mxu0 0
    %178 = vmatpush1.bf16.msra.mxu0 0
    %179 = vmatprep.subr.bf16.mxu0 0
    %180 = vmatpush1.bf16.msra.mxu0 0
    %181 = vmatprep.subr.bf16.mxu0 0
    %182 = vmatpush1.bf16.msra.mxu0 0
    %183 = vmatprep.subr.bf16.mxu0 0
    %184 = vmatpush1.bf16.msra.mxu0 0
    %185 = vmatprep.subr.bf16.mxu0 0
    %186 = vmatpush1.bf16.msra.mxu0 0
    %187 = vmatprep.subr.bf16.mxu0 0
    %188 = vmatpush1.bf16.msra.mxu0 0
    %189 = vmatprep.subr.bf16.mxu0 0
    %190 = vmatpush1.bf16.msra.mxu0 0
    %191 = vmatprep.mubr.bf16.mxu0 0
    %192 = vmatmul.mubr.bf16.gmra.mrb[0].mxu0 %v87
    %v193 = vpop.f32.mrb[0].mxu0
    %v194 = vadd.f32 %v109, %v193
    %v195 = vpop.f32.mrb[0].mxu0
    %v196 = vpop.f32.mrb[0].mxu0
    %v197 = vpop.f32.mrb[0].mxu0
    %198 = vdwg.mxu0
    %v199 = vmax.f32 %v194, 0.0
    %v200 = vmin.f32 %v199, 6.0
    %v201 = vpack.c.bf16 %v200, %v200
    %v202 = vld [vmem:[%s5] sm:$0xf]
    %v203 = vld [vmem:[%s5 + $0x4] sm:$0xf]
    %v204 = vld [vmem:[%s5 + $0x8] sm:$0xf]
    %v205 = vld [vmem:[%s5 + $0xc] sm:$0xf]
    %v206 = vld [vmem:[%s5 + $0x10] sm:$0xf]
    %v207 = vld [vmem:[%s5 + $0x14] sm:$0xf]
    %v208 = vld [vmem:[%s5 + $0x18] sm:$0xf]
    %v209 = vld [vmem:[%s5 + $0x1c] sm:$0xf]
    %v210 = vld [vmem:[%s6] sm:$0x1]
    %v212 = vlaneseq
    %v213 = vshrl.u32 %v212, 7
    %v214 = vsub.s32 0, %v213
    %v215 = vrot.slane %v210, %v214
    %v225 = vunpack.c.l.b16 %v202
    %v226 = vunpack.c.l.b16 %v203
    %v227 = vunpack.c.l.b16 %v204
    %v228 = vunpack.c.l.b16 %v205
    %v229 = vunpack.c.l.b16 %v206
    %v230 = vunpack.c.l.b16 %v207
    %v231 = vunpack.c.l.b16 %v208
    %v232 = vunpack.c.l.b16 %v209
    %v233 = vpack.c.b16 %v226, %v225
    %v234 = vpack.c.b16 %v228, %v227
    %v235 = vpack.c.b16 %v230, %v229
    %v236 = vpack.c.b16 %v232, %v231
    %vm241 = vcmask 523264
    %v243 = vsel %vm241, %v201, 0
    %245 = vmatprep.subr.bf16.mxu0 0
    %246 = vmatpush1.bf16.msra.mxu0 %v233
    %247 = vmatprep.subr.bf16.mxu0 0
    %248 = vmatpush1.bf16.msra.mxu0 %v234
    %249 = vmatprep.subr.bf16.mxu0 0
    %250 = vmatpush1.bf16.msra.mxu0 %v235
    %251 = vmatprep.subr.bf16.mxu0 0
    %252 = vmatpush1.bf16.msra.mxu0 %v236
    %253 = vmatprep.subr.bf16.mxu0 0
    %254 = vmatpush1.bf16.msra.mxu0 0
    %255 = vmatprep.subr.bf16.mxu0 0
    %256 = vmatpush1.bf16.msra.mxu0 0
    %257 = vmatprep.subr.bf16.mxu0 0
    %258 = vmatpush1.bf16.msra.mxu0 0
    %259 = vmatprep.subr.bf16.mxu0 0
    %260 = vmatpush1.bf16.msra.mxu0 0
    %261 = vmatprep.subr.bf16.mxu0 0
    %262 = vmatpush1.bf16.msra.mxu0 0
    %263 = vmatprep.subr.bf16.mxu0 0
    %264 = vmatpush1.bf16.msra.mxu0 0
    %265 = vmatprep.subr.bf16.mxu0 0
    %266 = vmatpush1.bf16.msra.mxu0 0
    %267 = vmatprep.subr.bf16.mxu0 0
    %268 = vmatpush1.bf16.msra.mxu0 0
    %269 = vmatprep.subr.bf16.mxu0 0
    %270 = vmatpush1.bf16.msra.mxu0 0
    %271 = vmatprep.subr.bf16.mxu0 0
    %272 = vmatpush1.bf16.msra.mxu0 0
    %273 = vmatprep.subr.bf16.mxu0 0
    %274 = vmatpush1.bf16.msra.mxu0 0
    %275 = vmatprep.subr.bf16.mxu0 0
    %276 = vmatpush1.bf16.msra.mxu0 0
    %277 = vmatprep.mubr.bf16.mxu0 0
    %278 = vmatmul.mubr.bf16.gmra.mrb[0].mxu0 %v243
    %v279 = vpop.f32.mrb[0].mxu0
    %v280 = vadd.f32 %v215, %v279
    %v281 = vpop.f32.mrb[0].mxu0
    %v282 = vpop.f32.mrb[0].mxu0
    %v283 = vpop.f32.mrb[0].mxu0
    %284 = vdwg.mxu0
    %285 = vst [vmem:[#allocation2] sm:$0xff] %v280
    // Predicated region
    $region30: #{tpu_custom_call.1} parent=1 // pred_check
      _
    $region31: #{tpu_custom_call.1} parent=1 // pred_check_branch
      %287 = sbr.rel (0) target = $region33
    $region32: #{tpu_custom_call.1} parent=1 // pred_region
      %s289 = ssub.s32 128, 128
      %290 = vsyncadd [#allocation3], %s289
      %s292 = sshll.u32 [#allocation2], 4
      %s293 = int_to_ptr.vmem [resolvable:$true] %s292
      %295 = dma.vmem_to_hbm [thread:$0]  %s293, 128, %s7, [#allocation3]
    $region33: #{tpu_custom_call.1} parent=1 // pred_fallthru
      _
    // Predicated region
    $region34: #{tpu_custom_call.1} parent=1 // pred_check
      _
    $region35: #{tpu_custom_call.1} parent=1 // pred_check_branch
      %297 = sbr.rel (0) target = $region37
    $region36: #{tpu_custom_call.1} parent=1 // pred_region
      %298 = dma.done [#allocation3], 128
    $region37: #{tpu_custom_call.1} parent=1 // pred_fallthru
      _
    %299 = vsyncpa [#allocation3], 1

</llo_original>
